<compile_context>
chip_gen: v6e
topology: v6e:2x2x1
jax: 0.10.0
libtpu: 0.0.40
codegen_flags: <defaults>
</compile_context>

<pallas_src>
import jax
import jax.numpy as jnp
from jax.experimental import pallas as pl
from jax.experimental.pallas import tpu as pltpu

C_IN = 112
C_OUT = 448
C_IN_PAD = 128    # lane-aligned contraction dim
C_OUT_PAD = 512   # lane-dense output dim (multiple of 128)


def _round_up(x, m):
    return ((x + m - 1) // m) * m


def _relu_matmul_sigmoid_kernel(x_ref, w_ref, b_ref, o_ref):
    # x_ref: (TILE_N, C_IN_PAD) bf16, w_ref: (C_IN_PAD, C_OUT_PAD) bf16,
    # b_ref: (1, C_OUT_PAD) f32,  o_ref: (TILE_N, C_OUT_PAD) f32
    # ReLU in f32 (exact; v5e VPU has no bf16), then bf16 operands for the MXU.
    x = jnp.maximum(x_ref[...].astype(jnp.float32), 0.0).astype(jnp.bfloat16)
    y = jnp.dot(x, w_ref[...], preferred_element_type=jnp.float32)   # MXU, f32 acc
    y = y + b_ref[...]                                               # bias (f32)
    # sigmoid(y) = 1 / (1 + exp(-y)); exp on EUP, approx reciprocal on EUP.
    o_ref[...] = pl.reciprocal(1.0 + jnp.exp(-y), approx=True)


def relu_conv1x1_sigmoid(x_nchw, weight, bias, *, tile_n=256):
    """x_nchw: (N, 112, 1, 1); weight: (448, 112, 1, 1); bias: (448,)."""
    n, c, h, w = x_nchw.shape
    assert c == C_IN and h == 1 and w == 1

    # Flatten NCHW -> (N, C_in); pad channels to lane-aligned widths.
    x2d = x_nchw.reshape(n, C_IN)
    x2d = jnp.pad(x2d, ((0, 0), (0, C_IN_PAD - C_IN))).astype(jnp.bfloat16)

    w2d = weight.reshape(C_OUT, C_IN).T                     # (C_IN, C_OUT)
    w2d = jnp.pad(w2d, ((0, C_IN_PAD - C_IN),
                        (0, C_OUT_PAD - C_OUT))).astype(jnp.bfloat16)
    b2d = jnp.pad(bias.reshape(1, C_OUT),
                  ((0, 0), (0, C_OUT_PAD - C_OUT))).astype(jnp.float32)

    # Batch tile: multiple of 16 (bf16 sublane packing), capped at tile_n.
    tile_n = min(tile_n, _round_up(max(n, 1), 16))
    grid = (pl.cdiv(n, tile_n),)

    # Explicit VMEM budget: double-buffered x/out tiles + resident W/b + headroom.
    vmem_bytes = (2 * tile_n * (C_IN_PAD * 2 + C_OUT_PAD * 4)
                  + 2 * (C_IN_PAD * C_OUT_PAD * 2 + C_OUT_PAD * 4)
                  + (4 << 20))

    out_padded = pl.pallas_call(
        _relu_matmul_sigmoid_kernel,
        out_shape=jax.ShapeDtypeStruct((n, C_OUT_PAD), jnp.float32),
        grid=grid,
        in_specs=[
            pl.BlockSpec((tile_n, C_IN_PAD), lambda i: (i, 0)),     # x tile
            pl.BlockSpec((C_IN_PAD, C_OUT_PAD), lambda i: (0, 0)),  # W (resident)
            pl.BlockSpec((1, C_OUT_PAD), lambda i: (0, 0)),         # b (resident)
        ],
        out_specs=pl.BlockSpec((tile_n, C_OUT_PAD), lambda i: (i, 0)),
        compiler_params=pltpu.CompilerParams(
            dimension_semantics=("parallel",),
            vmem_limit_bytes=int(vmem_bytes),
        ),
    )(x2d, w2d, b2d)

    return out_padded[:, :C_OUT].reshape(n, C_OUT, 1, 1)


if __name__ == "__main__":
    key = jax.random.PRNGKey(0)
    kx, kw, kb = jax.random.split(key, 3)

    # Small input consistent with the module: NCHW with C=112, spatial 1x1.
    x = jax.random.normal(kx, (2, C_IN, 1, 1), dtype=jnp.float32)

    # Deterministic synthetic parameters matching Conv2d(112, 448, 1x1) shapes.
    fan_in = C_IN * 1 * 1
    bound = 1.0 / (fan_in ** 0.5)
    weight = jax.random.uniform(kw, (C_OUT, C_IN, 1, 1), jnp.float32, -bound, bound)
    bias = jax.random.uniform(kb, (C_OUT,), jnp.float32, -bound, bound)

    out = relu_conv1x1_sigmoid(x, weight, bias)
    jax.block_until_ready(out)

    # Reference check in plain f32 JAX (kernel uses bf16 MXU operands +
    # approx reciprocal, so tolerance is loosened accordingly).
    x2d = jnp.maximum(x.reshape(2, C_IN), 0.0)
    ref = jax.nn.sigmoid(x2d @ weight.reshape(C_OUT, C_IN).T + bias)
    ref = ref.reshape(2, C_OUT, 1, 1)
    assert out.shape == (2, C_OUT, 1, 1)
    assert jnp.allclose(out, ref, atol=1e-2, rtol=1e-2), float(
        jnp.max(jnp.abs(out - ref)))

    print("KERNEL_OK")
</pallas_src>

<mosaic_0001>
module attributes {stable_mosaic.version = 11 : i64} {
  func.func @_relu_matmul_sigmoid_kernel(%arg0: i32, %arg1: memref<16x128xbf16, #tpu.memory_space<vmem>>, %arg2: memref<128x512xbf16, #tpu.memory_space<vmem>>, %arg3: memref<1x512xf32, #tpu.memory_space<vmem>>, %arg4: memref<16x512xf32, #tpu.memory_space<vmem>>) attributes {dimension_semantics = [#tpu.dimension_semantics<parallel>], iteration_bounds = array<i64: 1>, scalar_prefetch = 0 : i64, scratch_operands = 0 : i64, tpu.core_type = #tpu.core_type<tc>, window_params = [{transform_indices = @transform_0, window_bounds = array<i64: 16, 128>}, {pipeline_mode = #tpu.pipeline_mode<synchronous>, transform_indices = @transform_1, window_bounds = array<i64: 128, 512>}, {pipeline_mode = #tpu.pipeline_mode<synchronous>, transform_indices = @transform_2, window_bounds = array<i64: 1, 512>}, {transform_indices = @transform_3, window_bounds = array<i64: 16, 512>}]} {
    %c0 = arith.constant 0 : index
    %c0_0 = arith.constant 0 : index
    %0 = vector.load %arg1[%c0, %c0_0] : memref<16x128xbf16, #tpu.memory_space<vmem>>, vector<16x128xbf16>
    %1 = arith.extf %0 : vector<16x128xbf16> to vector<16x128xf32>
    %cst = arith.constant 0.000000e+00 : f32
    %2 = vector.broadcast %cst : f32 to vector<16x128xf32>
    %3 = arith.maximumf %1, %2 : vector<16x128xf32>
    %4 = arith.truncf %3 : vector<16x128xf32> to vector<16x128xbf16>
    %c0_1 = arith.constant 0 : index
    %c0_2 = arith.constant 0 : index
    %5 = vector.load %arg2[%c0_1, %c0_2] : memref<128x512xbf16, #tpu.memory_space<vmem>>, vector<128x512xbf16>
    %cst_3 = arith.constant dense<0.000000e+00> : vector<16x512xf32>
    %6 = tpu.matmul %4, %5, %cst_3 {dimension_numbers = #tpu.dot_dimension_numbers<[1], [0], [0], [1], [0, 0, 1, 1], [], []>} : vector<16x128xbf16>, vector<128x512xbf16>, vector<16x512xf32> -> vector<16x512xf32>
    %c0_4 = arith.constant 0 : index
    %c0_5 = arith.constant 0 : index
    %7 = vector.load %arg3[%c0_4, %c0_5] : memref<1x512xf32, #tpu.memory_space<vmem>>, vector<1x512xf32>
    %8 = vector.broadcast %7 : vector<1x512xf32> to vector<16x512xf32>
    %9 = arith.addf %6, %8 : vector<16x512xf32>
    %cst_6 = arith.constant 0.000000e+00 : f32
    %10 = vector.broadcast %cst_6 : f32 to vector<16x512xf32>
    %11 = arith.subf %10, %9 : vector<16x512xf32>
    %12 = math.exp %11 : vector<16x512xf32>
    %cst_7 = arith.constant 1.000000e+00 : f32
    %13 = vector.broadcast %cst_7 : f32 to vector<16x512xf32>
    %14 = arith.addf %13, %12 : vector<16x512xf32>
    %15 = tpu.reciprocal %14 {approx = true} : vector<16x512xf32> -> vector<16x512xf32>
    %c0_8 = arith.constant 0 : index
    %c0_9 = arith.constant 0 : index
    %16 = vector.load %arg4[%c0_8, %c0_9] : memref<16x512xf32, #tpu.memory_space<vmem>>, vector<16x512xf32>
    tpu.vector_store %arg4[%c0_8, %c0_9], %15 {strides = array<i32>} : memref<16x512xf32, #tpu.memory_space<vmem>>, vector<16x512xf32>,
    return
  }
  func.func @transform_0(%arg0: i32) -> (i32, i32) {
    %c0_i32 = arith.constant 0 : i32
    %c0_i32_0 = arith.constant 0 : i32
    return %arg0, %c0_i32 : i32, i32
  }
  func.func @transform_1(%arg0: i32) -> (i32, i32) {
    %c0_i32 = arith.constant 0 : i32
    %c0_i32_0 = arith.constant 0 : i32
    %c0_i32_1 = arith.constant 0 : i32
    return %c0_i32, %c0_i32_0 : i32, i32
  }
  func.func @transform_2(%arg0: i32) -> (i32, i32) {
    %c0_i32 = arith.constant 0 : i32
    %c0_i32_0 = arith.constant 0 : i32
    %c0_i32_1 = arith.constant 0 : i32
    return %c0_i32, %c0_i32_0 : i32, i32
  }
  func.func @transform_3(%arg0: i32) -> (i32, i32) {
    %c0_i32 = arith.constant 0 : i32
    %c0_i32_0 = arith.constant 0 : i32
    return %arg0, %c0_i32 : i32, i32
  }
}

</mosaic_0001>

<llo_original>
// kernel: tpu_custom_call.1
$region0: #{tpu_custom_call.1}
  #allocation0 [shape = 'u32[]', space=smem, size = 0x4, offset = 0x4, fixed_abs, tag = 'smem constant byte address 0x4 - core index']
  #allocation1 [shape = 'u32[144,128]{1,0:T(1,128)}', space=vmem, size = 0x12000, scoped, tag = 'internal scratch']
  %s0 = inlined_call_operand.hbm [shape: bf16[2,128], index: 0, kind: input, shape index: {}]
  %s1 = inlined_call_operand.hbm [shape: bf16[128,512], index: 1, kind: input, shape index: {}]
  %s2 = inlined_call_operand.hbm [shape: f32[1,512], index: 2, kind: input, shape index: {}]
  %s3 = inlined_call_operand.hbm [shape: f32[2,512], index: 3, kind: output, shape index: {}]
  %s4 = sld [smem:[#allocation0]]
  $region34: #{tpu_custom_call.1} parent=0
    _
  %s6 = ssub.s32 1, %s4
  %s7 = scalar_select 0, %s6, %s4
  $region1: #{tpu_custom_call.1} parent=0
    #allocation2 [shape = 'u8[4096]{0}', space=vmem, size = 0x1000, scoped, tag = 'input window, operand 0, single buffered']
    #allocation3 [shape = 's32[1]{0}', space=sflag, size = 0x4, scoped, tag = 'scoped memory for tpu_custom_call.1']
    #allocation4 [shape = 's32[1]{0}', space=sflag, size = 0x4, scoped, tag = 'scoped memory for tpu_custom_call.1']
    #allocation5 [shape = 'u8[131072]{0}', space=vmem, size = 0x20000, scoped, tag = 'input window, operand 1, single buffered']
    #allocation6 [shape = 's32[1]{0}', space=sflag, size = 0x4, scoped, tag = 'scoped memory for tpu_custom_call.1']
    #allocation7 [shape = 'u8[2048]{0}', space=vmem, size = 0x800, scoped, tag = 'input window, operand 2, single buffered']
    #allocation8 [shape = 'u8[32768]{0}', space=vmem, size = 0x8000, scoped, tag = 'output window, operand 0, single buffered']
    %8 = vsyncpa [#allocation3], 0
    %9 = vsyncpa [#allocation6], 0
    %10 = vsyncpa [#allocation4], 0
    // Predicated region
    $region2: #{tpu_custom_call.1} parent=1 // pred_check
      _
    $region3: #{tpu_custom_call.1} parent=1 // pred_check_branch
      %12 = sbr.rel (0) target = $region5
    $region4: #{tpu_custom_call.1} parent=1 // pred_region
      %s14 = ssub.s32 128, 16
      %15 = vsyncadd [#allocation3], %s14
      %s16 = sshll.u32 [#allocation2], 4
      %s17 = int_to_ptr.vmem [resolvable:$true] %s16
      %22 = dma.hbm_to_vmem [thread:$0]  %s0, 16, %s17, [#allocation3], 16, 16, 1
    $region5: #{tpu_custom_call.1} parent=1 // pred_fallthru
      _
    // Predicated region
    $region6: #{tpu_custom_call.1} parent=1 // pred_check
      _
    $region7: #{tpu_custom_call.1} parent=1 // pred_check_branch
      %24 = sbr.rel (0) target = $region9
    $region8: #{tpu_custom_call.1} parent=1 // pred_region
      %s26 = ssub.s32 4096, 4096
      %27 = vsyncadd [#allocation6], %s26
      %s28 = sshll.u32 [#allocation5], 4
      %s29 = int_to_ptr.vmem [resolvable:$true] %s28
      %34 = dma.hbm_to_vmem [thread:$0]  %s1, 4096, %s29, [#allocation6], 256, 256, 16
    $region9: #{tpu_custom_call.1} parent=1 // pred_fallthru
      _
    // Predicated region
    $region10: #{tpu_custom_call.1} parent=1 // pred_check
      _
    $region11: #{tpu_custom_call.1} parent=1 // pred_check_branch
      %36 = sbr.rel (0) target = $region13
    $region12: #{tpu_custom_call.1} parent=1 // pred_region
      %s38 = ssub.s32 64, 64
      %39 = vsyncadd [#allocation6], %s38
      %s41 = sshll.u32 [#allocation7], 4
      %s42 = int_to_ptr.vmem [resolvable:$true] %s41
      %44 = dma.hbm_to_vmem [thread:$0]  %s2, 64, %s42, [#allocation6]
    $region13: #{tpu_custom_call.1} parent=1 // pred_fallthru
      _
    // Predicated region
    $region14: #{tpu_custom_call.1} parent=1 // pred_check
      _
    $region15: #{tpu_custom_call.1} parent=1 // pred_check_branch
      %46 = sbr.rel (0) target = $region17
    $region16: #{tpu_custom_call.1} parent=1 // pred_region
      %47 = dma.done [#allocation3], 128
    $region17: #{tpu_custom_call.1} parent=1 // pred_fallthru
      _
    // Predicated region
    $region18: #{tpu_custom_call.1} parent=1 // pred_check
      _
    $region19: #{tpu_custom_call.1} parent=1 // pred_check_branch
      %49 = sbr.rel (0) target = $region21
    $region20: #{tpu_custom_call.1} parent=1 // pred_region
      %50 = dma.done [#allocation6], 4096
    $region21: #{tpu_custom_call.1} parent=1 // pred_fallthru
      _
    // Predicated region
    $region22: #{tpu_custom_call.1} parent=1 // pred_check
      _
    $region23: #{tpu_custom_call.1} parent=1 // pred_check_branch
      %52 = sbr.rel (0) target = $region25
    $region24: #{tpu_custom_call.1} parent=1 // pred_region
      %53 = dma.done [#allocation6], 64
    $region25: #{tpu_custom_call.1} parent=1 // pred_fallthru
      _
    %v55 = vld [vmem:[#allocation2] sm:$0x1]
    %v56 = vld [vmem:[#allocation2 + $0x1] sm:$0x1]
    %v57 = vld [vmem:[#allocation2 + $0x2] sm:$0x1]
    %v58 = vld [vmem:[#allocation2 + $0x3] sm:$0x1]
    %v59 = vld [vmem:[#allocation2 + $0x4] sm:$0x1]
    %v60 = vld [vmem:[#allocation2 + $0x5] sm:$0x1]
    %v61 = vld [vmem:[#allocation2 + $0x6] sm:$0x1]
    %v62 = vld [vmem:[#allocation2 + $0x7] sm:$0x1]
    %v63 = vunpack.c.l.bf16 %v55
    %v64 = vunpack.c.l.bf16 %v56
    %v65 = vunpack.c.l.bf16 %v57
    %v66 = vunpack.c.l.bf16 %v58
    %v67 = vunpack.c.l.bf16 %v59
    %v68 = vunpack.c.l.bf16 %v60
    %v69 = vunpack.c.l.bf16 %v61
    %v70 = vunpack.c.l.bf16 %v62
    %v71 = vmax.f32 %v63, 0.0
    %v72 = vmax.f32 %v64, 0.0
    %v73 = vmax.f32 %v65, 0.0
    %v74 = vmax.f32 %v66, 0.0
    %v75 = vmax.f32 %v67, 0.0
    %v76 = vmax.f32 %v68, 0.0
    %v77 = vmax.f32 %v69, 0.0
    %v78 = vmax.f32 %v70, 0.0
    %v87 = vcombine.low %v71, %v72
    %v88 = vcombine.low %v73, %v74
    %v90 = vunpack.c.l.s4 1983009808
    %v91 = vunpack.c.0.s8 %v90
    %v92 = vlaneseq
    %v93 = vshrl.u32 %v92, 7
    %v94 = vsub.s32 %v91, %v93
    %v95 = vrot.slane %v87, %v94
    %v97 = vunpack.c.l.s4 1983009808
    %v98 = vunpack.c.0.s8 %v97
    %v99 = vlaneseq
    %v100 = vshrl.u32 %v99, 7
    %v101 = vsub.s32 %v98, %v100
    %v102 = vrot.slane %v88, %v101
    %v103 = vcombine.low %v95, %v102
    %v104 = vcombine.low %v75, %v76
    %v105 = vcombine.low %v77, %v78
    %v107 = vunpack.c.l.s4 1983009808
    %v108 = vunpack.c.0.s8 %v107
    %v109 = vlaneseq
    %v110 = vshrl.u32 %v109, 7
    %v111 = vsub.s32 %v108, %v110
    %v112 = vrot.slane %v104, %v111
    %v114 = vunpack.c.l.s4 1983009808
    %v115 = vunpack.c.0.s8 %v114
    %v116 = vlaneseq
    %v117 = vshrl.u32 %v116, 7
    %v118 = vsub.s32 %v115, %v117
    %v119 = vrot.slane %v105, %v118
    %v120 = vcombine.low %v112, %v119
    %v123 = vpack.c.bf16 %v120, %v103
    %v124 = vld [vmem:[#allocation5] sm:$0xff]
    %v125 = vld [vmem:[#allocation5 + $0x8] sm:$0xff]
    %v126 = vld [vmem:[#allocation5 + $0x10] sm:$0xff]
    %v127 = vld [vmem:[#allocation5 + $0x18] sm:$0xff]
    %v128 = vld [vmem:[#allocation5 + $0x20] sm:$0xff]
    %v129 = vld [vmem:[#allocation5 + $0x28] sm:$0xff]
    %v130 = vld [vmem:[#allocation5 + $0x30] sm:$0xff]
    %v131 = vld [vmem:[#allocation5 + $0x38] sm:$0xff]
    %v132 = vld [vmem:[#allocation5 + $0x40] sm:$0xff]
    %v133 = vld [vmem:[#allocation5 + $0x48] sm:$0xff]
    %v134 = vld [vmem:[#allocation5 + $0x50] sm:$0xff]
    %v135 = vld [vmem:[#allocation5 + $0x58] sm:$0xff]
    %v136 = vld [vmem:[#allocation5 + $0x60] sm:$0xff]
    %v137 = vld [vmem:[#allocation5 + $0x68] sm:$0xff]
    %v138 = vld [vmem:[#allocation5 + $0x70] sm:$0xff]
    %v139 = vld [vmem:[#allocation5 + $0x78] sm:$0xff]
    %v140 = vld [vmem:[#allocation5 + $0x80] sm:$0xff]
    %v141 = vld [vmem:[#allocation5 + $0x88] sm:$0xff]
    %v142 = vld [vmem:[#allocation5 + $0x90] sm:$0xff]
    %v143 = vld [vmem:[#allocation5 + $0x98] sm:$0xff]
    %v144 = vld [vmem:[#allocation5 + $0xa0] sm:$0xff]
    %v145 = vld [vmem:[#allocation5 + $0xa8] sm:$0xff]
    %v146 = vld [vmem:[#allocation5 + $0xb0] sm:$0xff]
    %v147 = vld [vmem:[#allocation5 + $0xb8] sm:$0xff]
    %v148 = vld [vmem:[#allocation5 + $0xc0] sm:$0xff]
    %v149 = vld [vmem:[#allocation5 + $0xc8] sm:$0xff]
    %v150 = vld [vmem:[#allocation5 + $0xd0] sm:$0xff]
    %v151 = vld [vmem:[#allocation5 + $0xd8] sm:$0xff]
    %v152 = vld [vmem:[#allocation5 + $0xe0] sm:$0xff]
    %v153 = vld [vmem:[#allocation5 + $0xe8] sm:$0xff]
    %v154 = vld [vmem:[#allocation5 + $0xf0] sm:$0xff]
    %v155 = vld [vmem:[#allocation5 + $0xf8] sm:$0xff]
    %v156 = vld [vmem:[#allocation7] sm:$0xf]
    %v158 = vlaneseq
    %v159 = vshrl.u32 %v158, 7
    %v160 = vsub.s32 0, %v159
    %v161 = vrot.slane %v156, %v160
    %v162 = vlaneseq
    %v163 = vshrl.u32 %v162, 7
    %v164 = vsub.s32 1, %v163
    %v165 = vrot.slane %v156, %v164
    %v166 = vlaneseq
    %v167 = vshrl.u32 %v166, 7
    %v168 = vsub.s32 2, %v167
    %v169 = vrot.slane %v156, %v168
    %v170 = vlaneseq
    %v171 = vshrl.u32 %v170, 7
    %v172 = vsub.s32 3, %v171
    %v173 = vrot.slane %v156, %v172
    %v210 = vunpack.c.l.b16 %v124
    %v211 = vunpack.c.h.b16 %v124
    %v212 = vunpack.c.l.b16 %v125
    %v213 = vunpack.c.h.b16 %v125
    %v214 = vunpack.c.l.b16 %v126
    %v215 = vunpack.c.h.b16 %v126
    %v216 = vunpack.c.l.b16 %v127
    %v217 = vunpack.c.h.b16 %v127
    %v218 = vunpack.c.l.b16 %v128
    %v219 = vunpack.c.h.b16 %v128
    %v220 = vunpack.c.l.b16 %v129
    %v221 = vunpack.c.h.b16 %v129
    %v222 = vunpack.c.l.b16 %v130
    %v223 = vunpack.c.h.b16 %v130
    %v224 = vunpack.c.l.b16 %v131
    %v225 = vunpack.c.h.b16 %v131
    %v226 = vunpack.c.l.b16 %v132
    %v227 = vunpack.c.h.b16 %v132
    %v228 = vunpack.c.l.b16 %v133
    %v229 = vunpack.c.h.b16 %v133
    %v230 = vunpack.c.l.b16 %v134
    %v231 = vunpack.c.h.b16 %v134
    %v232 = vunpack.c.l.b16 %v135
    %v233 = vunpack.c.h.b16 %v135
    %v234 = vunpack.c.l.b16 %v136
    %v235 = vunpack.c.h.b16 %v136
    %v236 = vunpack.c.l.b16 %v137
    %v237 = vunpack.c.h.b16 %v137
    %v238 = vunpack.c.l.b16 %v138
    %v239 = vunpack.c.h.b16 %v138
    %v240 = vunpack.c.l.b16 %v139
    %v241 = vunpack.c.h.b16 %v139
    %v242 = vunpack.c.l.b16 %v140
    %v243 = vunpack.c.h.b16 %v140
    %v244 = vunpack.c.l.b16 %v141
    %v245 = vunpack.c.h.b16 %v141
    %v246 = vunpack.c.l.b16 %v142
    %v247 = vunpack.c.h.b16 %v142
    %v248 = vunpack.c.l.b16 %v143
    %v249 = vunpack.c.h.b16 %v143
    %v250 = vunpack.c.l.b16 %v144
    %v251 = vunpack.c.h.b16 %v144
    %v252 = vunpack.c.l.b16 %v145
    %v253 = vunpack.c.h.b16 %v145
    %v254 = vunpack.c.l.b16 %v146
    %v255 = vunpack.c.h.b16 %v146
    %v256 = vunpack.c.l.b16 %v147
    %v257 = vunpack.c.h.b16 %v147
    %v258 = vunpack.c.l.b16 %v148
    %v259 = vunpack.c.h.b16 %v148
    %v260 = vunpack.c.l.b16 %v149
    %v261 = vunpack.c.h.b16 %v149
    %v262 = vunpack.c.l.b16 %v150
    %v263 = vunpack.c.h.b16 %v150
    %v264 = vunpack.c.l.b16 %v151
    %v265 = vunpack.c.h.b16 %v151
    %v266 = vunpack.c.l.b16 %v152
    %v267 = vunpack.c.h.b16 %v152
    %v268 = vunpack.c.l.b16 %v153
    %v269 = vunpack.c.h.b16 %v153
    %v270 = vunpack.c.l.b16 %v154
    %v271 = vunpack.c.h.b16 %v154
    %v272 = vunpack.c.l.b16 %v155
    %v273 = vunpack.c.h.b16 %v155
    %v274 = vpack.c.b16 %v214, %v210
    %v275 = vpack.c.b16 %v215, %v211
    %v276 = vpack.c.b16 %v216, %v212
    %v277 = vpack.c.b16 %v217, %v213
    %v278 = vpack.c.b16 %v222, %v218
    %v279 = vpack.c.b16 %v223, %v219
    %v280 = vpack.c.b16 %v224, %v220
    %v281 = vpack.c.b16 %v225, %v221
    %v282 = vpack.c.b16 %v230, %v226
    %v283 = vpack.c.b16 %v231, %v227
    %v284 = vpack.c.b16 %v232, %v228
    %v285 = vpack.c.b16 %v233, %v229
    %v286 = vpack.c.b16 %v238, %v234
    %v287 = vpack.c.b16 %v239, %v235
    %v288 = vpack.c.b16 %v240, %v236
    %v289 = vpack.c.b16 %v241, %v237
    %v290 = vpack.c.b16 %v246, %v242
    %v291 = vpack.c.b16 %v247, %v243
    %v292 = vpack.c.b16 %v248, %v244
    %v293 = vpack.c.b16 %v249, %v245
    %v294 = vpack.c.b16 %v254, %v250
    %v295 = vpack.c.b16 %v255, %v251
    %v296 = vpack.c.b16 %v256, %v252
    %v297 = vpack.c.b16 %v257, %v253
    %v298 = vpack.c.b16 %v262, %v258
    %v299 = vpack.c.b16 %v263, %v259
    %v300 = vpack.c.b16 %v264, %v260
    %v301 = vpack.c.b16 %v265, %v261
    %v302 = vpack.c.b16 %v270, %v266
    %v303 = vpack.c.b16 %v271, %v267
    %v304 = vpack.c.b16 %v272, %v268
    %v305 = vpack.c.b16 %v273, %v269
    %338 = vmatprep.subr.bf16.mxu0 %v303
    %339 = vmatpush1.bf16.msra.mxu0 %v302
    %340 = vmatprep.subr.bf16.mxu0 %v299
    %341 = vmatpush1.bf16.msra.mxu0 %v298
    %342 = vmatprep.subr.bf16.mxu0 %v295
    %343 = vmatpush1.bf16.msra.mxu0 %v294
    %344 = vmatprep.subr.bf16.mxu0 %v291
    %345 = vmatpush1.bf16.msra.mxu0 %v290
    %346 = vmatprep.subr.bf16.mxu0 %v287
    %347 = vmatpush1.bf16.msra.mxu0 %v286
    %348 = vmatprep.subr.bf16.mxu0 %v283
    %349 = vmatpush1.bf16.msra.mxu0 %v282
    %350 = vmatprep.subr.bf16.mxu0 %v279
    %351 = vmatpush1.bf16.msra.mxu0 %v278
    %352 = vmatprep.subr.bf16.mxu0 %v275
    %353 = vmatpush1.bf16.msra.mxu0 %v274
    %354 = vmatprep.subr.bf16.mxu0 0
    %355 = vmatpush2.bf16.msra.mxu0 0
    %356 = vmatprep.subr.bf16.mxu0 0
    %357 = vmatpush2.bf16.msra.mxu0 0
    %358 = vmatprep.subr.bf16.mxu0 0
    %359 = vmatpush2.bf16.msra.mxu0 0
    %360 = vmatprep.subr.bf16.mxu0 0
    %361 = vmatpush2.bf16.msra.mxu0 0
    %362 = vmatprep.subr.bf16.mxu0 0
    %363 = vmatpush2.bf16.msra.mxu0 0
    %364 = vmatprep.subr.bf16.mxu0 0
    %365 = vmatpush2.bf16.msra.mxu0 0
    %366 = vmatprep.subr.bf16.mxu0 0
    %367 = vmatpush2.bf16.msra.mxu0 0
    %368 = vmatprep.subr.bf16.mxu0 0
    %369 = vmatpush2.bf16.msra.mxu0 0
    %370 = vmatprep.mubr.bf16.mxu0 0
    %371 = vmatmul.mubr.bf16.gmra.mxu0 %v123
    %v372 = vpop.f32.mrf.mxu0
    %v373 = vadd.f32 %v161, %v372
    %v374 = vpop.f32.mrf.mxu0
    %v375 = vadd.f32 %v165, %v374
    %v376 = vpop.f32.mrf.mxu0
    %v377 = vadd.f32 %v161, %v376
    %v378 = vpop.f32.mrf.mxu0
    %v379 = vadd.f32 %v165, %v378
    %380 = vdwg.mxu0
    %381 = vmatprep.subr.bf16.mxu0 %v305
    %382 = vmatpush1.bf16.msra.mxu0 %v304
    %383 = vmatprep.subr.bf16.mxu0 %v301
    %384 = vmatpush1.bf16.msra.mxu0 %v300
    %385 = vmatprep.subr.bf16.mxu0 %v297
    %386 = vmatpush1.bf16.msra.mxu0 %v296
    %387 = vmatprep.subr.bf16.mxu0 %v293
    %388 = vmatpush1.bf16.msra.mxu0 %v292
    %389 = vmatprep.subr.bf16.mxu0 %v289
    %390 = vmatpush1.bf16.msra.mxu0 %v288
    %391 = vmatprep.subr.bf16.mxu0 %v285
    %392 = vmatpush1.bf16.msra.mxu0 %v284
    %393 = vmatprep.subr.bf16.mxu0 %v281
    %394 = vmatpush1.bf16.msra.mxu0 %v280
    %395 = vmatprep.subr.bf16.mxu0 %v277
    %396 = vmatpush1.bf16.msra.mxu0 %v276
    %397 = vmatprep.subr.bf16.mxu0 0
    %398 = vmatpush2.bf16.msra.mxu0 0
    %399 = vmatprep.subr.bf16.mxu0 0
    %400 = vmatpush2.bf16.msra.mxu0 0
    %401 = vmatprep.subr.bf16.mxu0 0
    %402 = vmatpush2.bf16.msra.mxu0 0
    %403 = vmatprep.subr.bf16.mxu0 0
    %404 = vmatpush2.bf16.msra.mxu0 0
    %405 = vmatprep.subr.bf16.mxu0 0
    %406 = vmatpush2.bf16.msra.mxu0 0
    %407 = vmatprep.subr.bf16.mxu0 0
    %408 = vmatpush2.bf16.msra.mxu0 0
    %409 = vmatprep.subr.bf16.mxu0 0
    %410 = vmatpush2.bf16.msra.mxu0 0
    %411 = vmatprep.subr.bf16.mxu0 0
    %412 = vmatpush2.bf16.msra.mxu0 0
    %413 = vmatprep.mubr.bf16.mxu0 0
    %414 = vmatmul.mubr.bf16.gmra.mxu0 %v123
    %v415 = vpop.f32.mrf.mxu0
    %v416 = vadd.f32 %v169, %v415
    %v417 = vpop.f32.mrf.mxu0
    %v418 = vadd.f32 %v173, %v417
    %v419 = vpop.f32.mrf.mxu0
    %v420 = vadd.f32 %v169, %v419
    %v421 = vpop.f32.mrf.mxu0
    %v422 = vadd.f32 %v173, %v421
    %423 = vdwg.mxu0
    %v424 = vsub.f32 0.0, %v373
    %v425 = vsub.f32 0.0, %v375
    %v426 = vsub.f32 0.0, %v416
    %v427 = vsub.f32 0.0, %v418
    %v428 = vsub.f32 0.0, %v377
    %v429 = vsub.f32 0.0, %v379
    %v430 = vsub.f32 0.0, %v420
    %v431 = vsub.f32 0.0, %v422
    %v432 = vmul.f32 %v424, 1.442695
    %v433 = vpow.pop %v432
    %v434 = vmul.f32 %v425, 1.442695
    %v435 = vpow.pop %v434
    %v436 = vmul.f32 %v426, 1.442695
    %v437 = vpow.pop %v436
    %v438 = vmul.f32 %v427, 1.442695
    %v439 = vpow.pop %v438
    %v440 = vmul.f32 %v428, 1.442695
    %v441 = vpow.pop %v440
    %v442 = vmul.f32 %v429, 1.442695
    %v443 = vpow.pop %v442
    %v444 = vmul.f32 %v430, 1.442695
    %v445 = vpow.pop %v444
    %v446 = vmul.f32 %v431, 1.442695
    %v447 = vpow.pop %v446
    %v448 = vadd.f32 %v433, 1.0
    %v449 = vadd.f32 %v435, 1.0
    %v450 = vadd.f32 %v437, 1.0
    %v451 = vadd.f32 %v439, 1.0
    %v452 = vadd.f32 %v441, 1.0
    %v453 = vadd.f32 %v443, 1.0
    %v454 = vadd.f32 %v445, 1.0
    %v455 = vadd.f32 %v447, 1.0
    %v456 = vrcp.pop %v448
    %v457 = vrcp.pop %v449
    %v458 = vrcp.pop %v450
    %v459 = vrcp.pop %v451
    %v460 = vrcp.pop %v452
    %v461 = vrcp.pop %v453
    %v462 = vrcp.pop %v454
    %v463 = vrcp.pop %v455
    %v472 = vcombine.low %v456, %v457
    %v473 = vcombine.high %v456, %v457
    %v474 = vcombine.low %v458, %v459
    %v475 = vcombine.high %v458, %v459
    %v477 = vunpack.c.l.s4 1983009808
    %v478 = vunpack.c.0.s8 %v477
    %v479 = vlaneseq
    %v480 = vshrl.u32 %v479, 7
    %v481 = vsub.s32 %v478, %v480
    %v482 = vrot.slane %v472, %v481
    %v484 = vunpack.c.l.s4 1983009808
    %v485 = vunpack.c.0.s8 %v484
    %v486 = vlaneseq
    %v487 = vshrl.u32 %v486, 7
    %v488 = vsub.s32 %v485, %v487
    %v489 = vrot.slane %v473, %v488
    %v491 = vunpack.c.l.s4 1983009808
    %v492 = vunpack.c.0.s8 %v491
    %v493 = vlaneseq
    %v494 = vshrl.u32 %v493, 7
    %v495 = vsub.s32 %v492, %v494
    %v496 = vrot.slane %v474, %v495
    %v498 = vunpack.c.l.s4 1983009808
    %v499 = vunpack.c.0.s8 %v498
    %v500 = vlaneseq
    %v501 = vshrl.u32 %v500, 7
    %v502 = vsub.s32 %v499, %v501
    %v503 = vrot.slane %v475, %v502
    %v504 = vcombine.low %v482, %v496
    %v505 = vcombine.high %v482, %v496
    %v506 = vcombine.low %v489, %v503
    %v507 = vcombine.high %v489, %v503
    %v508 = vcombine.low %v460, %v461
    %v509 = vcombine.high %v460, %v461
    %v510 = vcombine.low %v462, %v463
    %v511 = vcombine.high %v462, %v463
    %v513 = vunpack.c.l.s4 1983009808
    %v514 = vunpack.c.0.s8 %v513
    %v515 = vlaneseq
    %v516 = vshrl.u32 %v515, 7
    %v517 = vsub.s32 %v514, %v516
    %v518 = vrot.slane %v508, %v517
    %v520 = vunpack.c.l.s4 1983009808
    %v521 = vunpack.c.0.s8 %v520
    %v522 = vlaneseq
    %v523 = vshrl.u32 %v522, 7
    %v524 = vsub.s32 %v521, %v523
    %v525 = vrot.slane %v509, %v524
    %v527 = vunpack.c.l.s4 1983009808
    %v528 = vunpack.c.0.s8 %v527
    %v529 = vlaneseq
    %v530 = vshrl.u32 %v529, 7
    %v531 = vsub.s32 %v528, %v530
    %v532 = vrot.slane %v510, %v531
    %v534 = vunpack.c.l.s4 1983009808
    %v535 = vunpack.c.0.s8 %v534
    %v536 = vlaneseq
    %v537 = vshrl.u32 %v536, 7
    %v538 = vsub.s32 %v535, %v537
    %v539 = vrot.slane %v511, %v538
    %v540 = vcombine.low %v518, %v532
    %v541 = vcombine.high %v518, %v532
    %v542 = vcombine.low %v525, %v539
    %v543 = vcombine.high %v525, %v539
    %552 = vst [vmem:[#allocation8] sm:$0xff] %v504
    %553 = vst [vmem:[#allocation8 + $0x8] sm:$0xff] %v505
    %554 = vst [vmem:[#allocation8 + $0x10] sm:$0xff] %v506
    %555 = vst [vmem:[#allocation8 + $0x18] sm:$0xff] %v507
    %556 = vst [vmem:[#allocation8 + $0x20] sm:$0xff] %v540
    %557 = vst [vmem:[#allocation8 + $0x28] sm:$0xff] %v541
    %558 = vst [vmem:[#allocation8 + $0x30] sm:$0xff] %v542
    %559 = vst [vmem:[#allocation8 + $0x38] sm:$0xff] %v543
    // Predicated region
    $region26: #{tpu_custom_call.1} parent=1 // pred_check
      _
    $region27: #{tpu_custom_call.1} parent=1 // pred_check_branch
      %561 = sbr.rel (0) target = $region29
    $region28: #{tpu_custom_call.1} parent=1 // pred_region
      %s563 = ssub.s32 1024, 128
      %564 = vsyncadd [#allocation4], %s563
      %s565 = sshll.u32 [#allocation8], 4
      %s566 = int_to_ptr.vmem [resolvable:$true] %s565
      %571 = dma.vmem_to_hbm [thread:$0]  %s566, 128, %s3, [#allocation4], 128, 128, 8
    $region29: #{tpu_custom_call.1} parent=1 // pred_fallthru
      _
    // Predicated region
    $region30: #{tpu_custom_call.1} parent=1 // pred_check
      _
    $region31: #{tpu_custom_call.1} parent=1 // pred_check_branch
      %573 = sbr.rel (0) target = $region33
    $region32: #{tpu_custom_call.1} parent=1 // pred_region
      %574 = dma.done [#allocation4], 1024
    $region33: #{tpu_custom_call.1} parent=1 // pred_fallthru
      _
    %575 = vsyncpa [#allocation3], 1
    %576 = vsyncpa [#allocation6], 1
    %577 = vsyncpa [#allocation4], 1

</llo_original>
